<compile_context>
chip_gen: v7x
topology: tpu7x:2x2x1
jax: 0.10.0
libtpu: 0.0.40
codegen_flags: <defaults>
</compile_context>

<pallas_src>
import jax
import jax.numpy as jnp
import numpy as np
from jax.experimental import pallas as pl
from jax.experimental.pallas import tpu as pltpu

# ---- small, module-consistent configuration -------------------------------
BATCH = 2
CHANNELS = 32
RATIO = 8
HIDDEN = CHANNELS // RATIO          # 4


# ---- Pallas kernel ---------------------------------------------------------
def senet_kernel(x_ref, w_ref, o_ref):
    h = w_ref.shape[0] // 2

    x = x_ref[...]                                   # [B, C] f32
    w_sq = w_ref[:h, :]                              # [H, C]  squeeze weight (PyTorch [out,in])
    w_ex = w_ref[h:, :]                              # [H, C]  excitation weight, pre-transposed

    # squeeze + ReLU:  g[b,h] = relu( sum_c x[b,c] * w_sq[h,c] )
    # VPU broadcast-multiply + XLU lane-reduce; keepdims keeps H on sublanes
    # so the excitation below needs no relayout.
    g = jnp.sum(x[:, None, :] * w_sq[None, :, :], axis=-1, keepdims=True)   # [B, H, 1]
    g = jnp.maximum(g, 0.0)

    # excitation:  e[b,c] = sum_h g[b,h] * w_ex[h,c]
    # lane-broadcast of g + VPU multiply + XLU sublane-reduce.
    e = jnp.sum(g * w_ex[None, :, :], axis=1)                               # [B, C]

    # sigmoid: exp on the EUP + reciprocal (exact; approx=True is an option at
    # scale but would relax the 1e-5 match against the reference).
    gate = pl.reciprocal(1.0 + jnp.exp(-e), approx=False)                   # [B, C]

    o_ref[...] = (x * gate).astype(o_ref.dtype)                             # x * gates


# ---- one-time parameter prep (hoisted out of the forward path) -------------
def prepare_senet_params(w_squeeze, w_excite):
    """Pack PyTorch-layout weights into a single [2H, C] operand, once.

    w_squeeze: [H, C] (nn.Linear [out, in]) — used as-is (contraction on C).
    w_excite : [C, H]                        — transposed once to [H, C].
    """
    w_sq = jnp.asarray(w_squeeze, jnp.float32)            # [H, C]
    w_ex_t = jnp.asarray(w_excite, jnp.float32).T         # [H, C]
    return jnp.concatenate([w_sq, w_ex_t], axis=0)        # [2H, C]


# ---- forward wrapper --------------------------------------------------------
@jax.jit
def senet_pallas(x, w_packed):
    """x: [B, C]; w_packed: [2H, C] from prepare_senet_params."""
    B, C = x.shape
    vmem = pltpu.MemorySpace.VMEM
    return pl.pallas_call(
        senet_kernel,
        out_shape=jax.ShapeDtypeStruct((B, C), x.dtype),
        # No grid: whole problem lives in VMEM for a single kernel invocation;
        # exactly one DMA per operand (x, packed weights) and one lane-dense store.
        in_specs=[
            pl.BlockSpec(memory_space=vmem),    # x
            pl.BlockSpec(memory_space=vmem),    # packed [w_squeeze ; w_excite.T]
        ],
        out_specs=pl.BlockSpec(memory_space=vmem),
    )(x, w_packed)
    # TODO(synk): at large batch, repack 4 samples per 128-lane row (x viewed as
    # [B/4, 128]) with block-diagonal weights built once in prepare_senet_params,
    # add a "parallel" row-tile grid axis (tile sized per-generation VMEM: 64 MiB
    # on v7x vs 128 MiB on v5e/v6e), and sweep ~512-2048 packed rows per tile.


# ---- pure-JAX reference (mirrors the PyTorch forward line by line) ----------
def senet_ref(x, w_squeeze, w_excite):
    gates = x @ w_squeeze.T            # self.sequeeze (bias=False)
    gates = jnp.maximum(gates, 0.0)    # self.relu
    gates = gates @ w_excite.T         # self.excitation (bias=False)
    gates = jax.nn.sigmoid(gates)      # self.sigmoid
    return x * gates                   # torch.mul(x, gates)


if __name__ == "__main__":
    key = jax.random.PRNGKey(0)
    k_in, k1, k2 = jax.random.split(key, 3)
    x = jax.random.normal(k_in, (BATCH, CHANNELS), jnp.float32)
    w_squeeze = jax.random.normal(k1, (HIDDEN, CHANNELS), jnp.float32) * 0.1
    w_excite = jax.random.normal(k2, (CHANNELS, HIDDEN), jnp.float32) * 0.1

    # Packed/transposed ONCE at parameter-prep time, not per forward call.
    w_packed = prepare_senet_params(w_squeeze, w_excite)

    out = senet_pallas(x, w_packed)
    out = jax.block_until_ready(out)

    ref = senet_ref(x, w_squeeze, w_excite)
    np.testing.assert_allclose(np.asarray(out), np.asarray(ref),
                               rtol=1e-5, atol=1e-5)
    print("KERNEL_OK")
</pallas_src>

<mosaic_0001>
module attributes {stable_mosaic.version = 11 : i64} {
  func.func @senet_kernel(%arg0: memref<2x32xf32, #tpu.memory_space<vmem>>, %arg1: memref<8x32xf32, #tpu.memory_space<vmem>>, %arg2: memref<2x32xf32, #tpu.memory_space<vmem>>) attributes {dimension_semantics = [], scalar_prefetch = 0 : i64, scratch_operands = 0 : i64, tpu.core_type = #tpu.core_type<tc>} {
    %c0 = arith.constant 0 : index
    %c0_0 = arith.constant 0 : index
    %0 = vector.load %arg0[%c0, %c0_0] : memref<2x32xf32, #tpu.memory_space<vmem>>, vector<2x32xf32>
    %c0_1 = arith.constant 0 : index
    %c0_2 = arith.constant 0 : index
    %1 = vector.load %arg1[%c0_1, %c0_2] : memref<8x32xf32, #tpu.memory_space<vmem>>, vector<4x32xf32>
    %c4 = arith.constant 4 : index
    %c0_3 = arith.constant 0 : index
    %2 = vector.load %arg1[%c4, %c0_3] : memref<8x32xf32, #tpu.memory_space<vmem>>, vector<4x32xf32>
    %3 = vector.shape_cast %0 : vector<2x32xf32> to vector<2x1x32xf32>
    %4 = vector.shape_cast %1 : vector<4x32xf32> to vector<1x4x32xf32>
    %5 = vector.broadcast %3 : vector<2x1x32xf32> to vector<2x4x32xf32>
    %6 = vector.broadcast %4 : vector<1x4x32xf32> to vector<2x4x32xf32>
    %7 = arith.mulf %5, %6 : vector<2x4x32xf32>
    %cst = arith.constant dense<0.000000e+00> : vector<2x4xf32>
    %8 = vector.multi_reduction <add>, %7, %cst [2] : vector<2x4x32xf32> to vector<2x4xf32>
    %9 = vector.shape_cast %8 : vector<2x4xf32> to vector<2x4x1xf32>
    %cst_4 = arith.constant 0.000000e+00 : f32
    %10 = vector.broadcast %cst_4 : f32 to vector<2x4x1xf32>
    %11 = arith.maximumf %9, %10 : vector<2x4x1xf32>
    %12 = vector.shape_cast %2 : vector<4x32xf32> to vector<1x4x32xf32>
    %13 = vector.broadcast %11 : vector<2x4x1xf32> to vector<2x4x32xf32>
    %14 = vector.broadcast %12 : vector<1x4x32xf32> to vector<2x4x32xf32>
    %15 = arith.mulf %13, %14 : vector<2x4x32xf32>
    %cst_5 = arith.constant dense<0.000000e+00> : vector<2x32xf32>
    %16 = vector.multi_reduction <add>, %15, %cst_5 [1] : vector<2x4x32xf32> to vector<2x32xf32>
    %cst_6 = arith.constant 0.000000e+00 : f32
    %17 = vector.broadcast %cst_6 : f32 to vector<2x32xf32>
    %18 = arith.subf %17, %16 : vector<2x32xf32>
    %19 = math.exp %18 : vector<2x32xf32>
    %cst_7 = arith.constant 1.000000e+00 : f32
    %20 = vector.broadcast %cst_7 : f32 to vector<2x32xf32>
    %21 = arith.addf %20, %19 : vector<2x32xf32>
    %22 = tpu.reciprocal %21 : vector<2x32xf32> -> vector<2x32xf32>
    %23 = arith.mulf %0, %22 : vector<2x32xf32>
    %c0_8 = arith.constant 0 : index
    %c0_9 = arith.constant 0 : index
    %24 = vector.load %arg2[%c0_8, %c0_9] : memref<2x32xf32, #tpu.memory_space<vmem>>, vector<2x32xf32>
    tpu.vector_store %arg2[%c0_8, %c0_9], %23 {strides = array<i32>} : memref<2x32xf32, #tpu.memory_space<vmem>>, vector<2x32xf32>,
    return
  }
}

</mosaic_0001>

<llo_original>
// kernel: senet_pallas.1
$region0: #{senet_pallas.1}
  #allocation0 [shape = 'u32[]', space=smem, size = 0x4, offset = 0x4, fixed_abs, tag = 'smem constant byte address 0x4 - core index']
  #allocation1 [shape = 'u32[144,128]{1,0:T(1,128)}', space=vmem, size = 0x12000, scoped, tag = 'internal scratch']
  %s0 = inlined_call_operand.hbm [shape: f32[2,32], index: 0, kind: input, shape index: {}]
  %s1 = inlined_call_operand.hbm [shape: f32[8,32], index: 1, kind: input, shape index: {}]
  %s2 = inlined_call_operand.hbm [shape: f32[2,32], index: 2, kind: output, shape index: {}]
  %s3 = sld [smem:[#allocation0]]
  $region26: #{senet_pallas.1} parent=0
    _
  %s5 = ssub.s32 1, %s3
  %s6 = scalar_select 0, %s5, %s3
  $region1: #{senet_pallas.1} parent=0
    #allocation2 [shape = 'u8[1024]{0}', space=vmem, size = 0x400, scoped, tag = 'input window, operand 0, single buffered']
    #allocation3 [shape = 's32[1]{0}', space=sflag, size = 0x4, scoped, tag = 'scoped memory for senet_pallas.1']
    #allocation4 [shape = 's32[1]{0}', space=sflag, size = 0x4, scoped, tag = 'scoped memory for senet_pallas.1']
    #allocation5 [shape = 'u8[4096]{0}', space=vmem, size = 0x1000, scoped, tag = 'input window, operand 1, single buffered']
    #allocation6 [shape = 's32[1]{0}', space=sflag, size = 0x4, scoped, tag = 'scoped memory for senet_pallas.1']
    #allocation7 [shape = 'u8[1024]{0}', space=vmem, size = 0x400, scoped, tag = 'output window, operand 0, single buffered']
    %7 = vsyncpa [#allocation3], 0
    %8 = vsyncpa [#allocation6], 0
    %9 = vsyncpa [#allocation4], 0
    // Predicated region
    $region2: #{senet_pallas.1} parent=1 // pred_check
      _
    $region3: #{senet_pallas.1} parent=1 // pred_check_branch
      %11 = sbr.rel (0) target = $region5
    $region4: #{senet_pallas.1} parent=1 // pred_region
      %s13 = ssub.s32 32, 32
      %14 = vsyncadd [#allocation3], %s13
      %s16 = sshll.u32 [#allocation2], 4
      %s17 = int_to_ptr.vmem [resolvable:$true] %s16
      %19 = dma.hbm_to_vmem [thread:$0]  %s0, 32, %s17, [#allocation3]
    $region5: #{senet_pallas.1} parent=1 // pred_fallthru
      _
    // Predicated region
    $region6: #{senet_pallas.1} parent=1 // pred_check
      _
    $region7: #{senet_pallas.1} parent=1 // pred_check_branch
      %21 = sbr.rel (0) target = $region9
    $region8: #{senet_pallas.1} parent=1 // pred_region
      %s23 = ssub.s32 128, 128
      %24 = vsyncadd [#allocation6], %s23
      %s26 = sshll.u32 [#allocation5], 4
      %s27 = int_to_ptr.vmem [resolvable:$true] %s26
      %29 = dma.hbm_to_vmem [thread:$0]  %s1, 128, %s27, [#allocation6]
    $region9: #{senet_pallas.1} parent=1 // pred_fallthru
      _
    // Predicated region
    $region10: #{senet_pallas.1} parent=1 // pred_check
      _
    $region11: #{senet_pallas.1} parent=1 // pred_check_branch
      %31 = sbr.rel (0) target = $region13
    $region12: #{senet_pallas.1} parent=1 // pred_region
      %32 = dma.done [#allocation3], 32
    $region13: #{senet_pallas.1} parent=1 // pred_fallthru
      _
    // Predicated region
    $region14: #{senet_pallas.1} parent=1 // pred_check
      _
    $region15: #{senet_pallas.1} parent=1 // pred_check_branch
      %34 = sbr.rel (0) target = $region17
    $region16: #{senet_pallas.1} parent=1 // pred_region
      %35 = dma.done [#allocation6], 128
    $region17: #{senet_pallas.1} parent=1 // pred_fallthru
      _
    %v36 = vld [vmem:[#allocation2] sm:$0x3]
    %v37 = vld [vmem:[#allocation5] sm:$0xf]
    %v38 = vld [vmem:[#allocation5 + $0x4] sm:$0xf]
    %v41 = vunpack.c.l.s4 1966171168
    %v42 = vunpack.c.0.s8 %v41
    %v43 = vlaneseq
    %v44 = vshrl.u32 %v43, 7
    %v45 = vsub.s32 %v42, %v44
    %v46 = vrot.slane %v36, %v45
    %v47 = vcombine.high %v46, %v46
    %v49 = vunpack.c.l.s4 1966171168
    %v50 = vunpack.c.0.s8 %v49
    %v51 = vlaneseq
    %v52 = vshrl.u32 %v51, 7
    %v53 = vsub.s32 %v50, %v52
    %v54 = vrot.slane %v46, %v53
    %v56 = vunpack.c.l.s4 1966171168
    %v57 = vunpack.c.0.s8 %v56
    %v58 = vlaneseq
    %v59 = vshrl.u32 %v58, 7
    %v60 = vsub.s32 %v57, %v59
    %v61 = vrot.slane %v47, %v60
    %v62 = vlaneseq
    %v63 = vshrl.u32 %v62, 7
    %v64 = vsub.s32 0, %v63
    %v65 = vrot.slane %v54, %v64
    %v66 = vlaneseq
    %v67 = vshrl.u32 %v66, 7
    %v68 = vsub.s32 0, %v67
    %v69 = vrot.slane %v61, %v68
    %v72 = vmul.f32 %v65, %v37
    %v73 = vmul.f32 %v69, %v37
    %vm74 = vcmask 257024
    %v75 = vsel %vm74, %v72, 0.0
    %76 = vadd.xlane.f32.xlu0 %v75
    %v77 = vpop.xlane.xlu0 %76
    %v78 = vsel %vm74, %v73, 0.0
    %79 = vadd.xlane.f32.xlu0 %v78
    %v80 = vpop.xlane.xlu0 %79
    %v81 = vmax.f32 %v77, 0.0
    %v82 = vmax.f32 %v80, 0.0
    %v83 = vmul.f32 %v81, %v38
    %v84 = vmul.f32 %v82, %v38
    %v85 = vsel %vm74, %v83, 0.0
    %v86 = vrot.slane %v85, 4
    %v87 = vadd.f32 %v85, %v86
    %v88 = vrot.slane %v87, 2
    %v89 = vadd.f32 %v87, %v88
    %v90 = vrot.slane %v89, 1
    %v91 = vadd.f32 %v89, %v90
    %v92 = vsel %vm74, %v84, 0.0
    %v93 = vrot.slane %v92, 4
    %v94 = vadd.f32 %v92, %v93
    %v95 = vrot.slane %v94, 2
    %v96 = vadd.f32 %v94, %v95
    %v97 = vrot.slane %v96, 1
    %v98 = vadd.f32 %v96, %v97
    %v99 = vsub.f32 0.0, %v91
    %v100 = vsub.f32 0.0, %v98
    %v101 = vmul.f32 %v99, 1.442695
    %v102 = vpow.pop %v101
    %v103 = vmul.f32 %v100, 1.442695
    %v104 = vpow.pop %v103
    %v105 = vadd.f32 %v102, 1.0
    %v106 = vadd.f32 %v104, 1.0
    %v107 = vrcp.pop %v105
    %v108 = vrcp.pop %v106
    %vm111 = vcmask 1041409
    %v112 = vsel %vm111, %v108, %v107
    %v114 = vmul.f32 %v36, %v112
    %vm115 = vcmask 254976
    %116 = vst.msk [vmem:[#allocation7] sm:$0x3] %vm115, %v114
    // Predicated region
    $region18: #{senet_pallas.1} parent=1 // pred_check
      _
    $region19: #{senet_pallas.1} parent=1 // pred_check_branch
      %118 = sbr.rel (0) target = $region21
    $region20: #{senet_pallas.1} parent=1 // pred_region
      %s120 = ssub.s32 32, 32
      %121 = vsyncadd [#allocation4], %s120
      %s123 = sshll.u32 [#allocation7], 4
      %s124 = int_to_ptr.vmem [resolvable:$true] %s123
      %126 = dma.vmem_to_hbm [thread:$0]  %s124, 32, %s2, [#allocation4]
    $region21: #{senet_pallas.1} parent=1 // pred_fallthru
      _
    // Predicated region
    $region22: #{senet_pallas.1} parent=1 // pred_check
      _
    $region23: #{senet_pallas.1} parent=1 // pred_check_branch
      %128 = sbr.rel (0) target = $region25
    $region24: #{senet_pallas.1} parent=1 // pred_region
      %129 = dma.done [#allocation4], 32
    $region25: #{senet_pallas.1} parent=1 // pred_fallthru
      _
    %130 = vsyncpa [#allocation3], 1
    %131 = vsyncpa [#allocation6], 1
    %132 = vsyncpa [#allocation4], 1

</llo_original>
